<compile_context>
chip_gen: v6e
topology: v6e:2x2x1
jax: 0.10.0
libtpu: 0.0.40
codegen_flags: <defaults>
</compile_context>

<pallas_src>
import jax
import jax.numpy as jnp
from jax import lax
from jax.experimental import pallas as pl
from jax.experimental.pallas import tpu as pltpu

_LANE = 128


def _make_kernel(bb, scale_operands):
    """Kernel producing one (bb, tm, tn) output block.

    p_ref : (bb, C, tm)                         native dtype
    q_ref : (bb, C, tn)                         native dtype
    ia_ref: (bb, 1, tm) if scale_operands else (bb, tm, 1)   f32 1/||p||
    ib_ref: (bb, 1, tn)                                       f32 1/||q||
    """

    def kernel(p_ref, q_ref, ia_ref, ib_ref, out_ref):
        # Static (unrolled) loop over folded batch elements; each iteration is
        # a plain 2-D MXU matmul contracting over C (dim 0 of both operands),
        # the same lowering as the proven single-batch kernel.
        for i in range(bb):
            p = p_ref[i]                                   # (C, tm)
            q = q_ref[i]                                   # (C, tn)
            if scale_operands:
                # Small C: scale the (C, tile) operands -> C*(tm+tn) mults.
                p = p * ia_ref[i].astype(p.dtype)          # (1, tm) broadcast
                q = q * ib_ref[i].astype(q.dtype)          # (1, tn) broadcast
            sim = lax.dot_general(
                p, q,
                dimension_numbers=(((0,), (0,)), ((), ())),
                preferred_element_type=jnp.float32,
            )                                              # (tm, tn) f32
            if not scale_operands:
                # Large C: scale the output instead -> 2*tm*tn mults, cheaper
                # once C exceeds ~tm.
                sim = sim * ia_ref[i] * ib_ref[i]          # (tm,1), (1,tn)
            out_ref[i] = sim.astype(out_ref.dtype)

    return kernel


def _padded_dim(d):
    # Large non-lane-aligned dims are padded so blocks stay lane-dense and
    # bounded (the old full-dim fallback could blow VMEM on v7x); dims <= 128
    # are legal as full-extent blocks and are left alone (avoids inflating
    # HBM writeback for small outputs).
    if d > _LANE and d % _LANE:
        return pl.cdiv(d, _LANE) * _LANE
    return d


def _tile_candidates(dim, preferred):
    # Largest-first multiples of 128 that divide `dim`; full-extent block for
    # small dims.
    if dim <= _LANE or dim % _LANE:
        return (dim,)
    cands = [t for t in range(_LANE, dim + 1, _LANE)
             if dim % t == 0 and t <= max(preferred, _LANE)]
    return tuple(sorted(cands, reverse=True))


def _vmem_limit_bytes():
    # Generation-aware budget: ~75% of physical VMEM (v7x: 64 MiB -> 48 MiB,
    # v5e/v6e: 128 MiB -> 96 MiB), leaving headroom for compiler scratch.
    try:
        phys = int(pltpu.get_tpu_info().vmem_capacity_bytes)
    except Exception:
        phys = 64 * 1024 * 1024      # assume the smallest (v7x) if query fails
    return min((phys * 3) // 4, 100 * 1024 * 1024)


def _footprint_bytes(bb, c, tm, tn, p_isz, q_isz, o_isz, q_bufs=2):
    return (bb * c * tm * p_isz * 2            # p block  (double-buffered)
            + bb * c * tn * q_isz * q_bufs     # q block  (streaming)
            + bb * tm * 4 * 2                  # inv_a block
            + bb * tn * 4 * q_bufs             # inv_b block
            + bb * tm * tn * o_isz * 2)        # output block


def criterion_cosine_similarity(p, q, *, tile_m=1024, tile_n=2048,
                                out_dtype=None):
    """p: (B, C, M), q: (B, C, N) -> (B, M, N)."""
    B, C, M = p.shape
    Bq, Cq, N = q.shape
    assert B == Bq and C == Cq, (p.shape, q.shape)

    if out_dtype is None:
        out_dtype = jnp.result_type(p.dtype, q.dtype)
    out_dtype = jnp.dtype(out_dtype)

    # Inverse L2 norms along C, computed once in the wrapper (tiny reductions,
    # EUP rsqrt) so the kernel's inner loop has no per-step norm recompute.
    # No epsilon, matching the PyTorch forward (all-zero columns -> inf/NaN).
    pf = p.astype(jnp.float32)
    qf = q.astype(jnp.float32)
    inv_a = lax.rsqrt(jnp.sum(pf * pf, axis=1))            # (B, M) f32
    inv_b = lax.rsqrt(jnp.sum(qf * qf, axis=1))            # (B, N) f32

    # Pad large unaligned M/N to a lane multiple. Padded p/q columns are zero
    # and padded inverse norms are zero, so padded outputs are exactly 0 and
    # sliced off below (never inf/NaN).
    Mp, Np = _padded_dim(M), _padded_dim(N)
    if Mp != M:
        p = jnp.pad(p, ((0, 0), (0, 0), (0, Mp - M)))
        inv_a = jnp.pad(inv_a, ((0, 0), (0, Mp - M)))
    if Np != N:
        q = jnp.pad(q, ((0, 0), (0, 0), (0, Np - N)))
        inv_b = jnp.pad(inv_b, ((0, 0), (0, Np - N)))

    p_isz = p.dtype.itemsize
    q_isz = q.dtype.itemsize
    o_isz = out_dtype.itemsize

    vmem_limit = _vmem_limit_bytes()
    budget = (vmem_limit * 4) // 5            # slack under the scoped limit

    # Pick the largest lane-aligned tiles whose pipelined footprint fits the
    # per-generation budget (this kernel is HBM-writeback-bound for small C).
    tm_cands = _tile_candidates(Mp, tile_m)
    tn_cands = _tile_candidates(Np, tile_n)
    im = jn = 0
    tm, tn = tm_cands[0], tn_cands[0]
    while _footprint_bytes(1, C, tm, tn, p_isz, q_isz, o_isz) > budget:
        can_m = im + 1 < len(tm_cands)
        can_n = jn + 1 < len(tn_cands)
        if not (can_m or can_n):
            break
        if can_n and (not can_m or tn >= tm):
            jn += 1
            tn = tn_cands[jn]
        else:
            im += 1
            tm = tm_cands[im]

    # Fold several batch elements per grid step when a single step already
    # covers the whole per-batch output (small problems): amortizes the fixed
    # per-step overhead of tiny / lane-masked stores.
    # TODO(synk): a fully lane-dense store for N < 128 would additionally need
    # a layout shuffle so the output's last dim is a multiple of 128.
    bb = 1
    if tm == Mp and tn == Np and B > 1:
        for d in range(1, B + 1):
            if B % d:
                continue
            if _footprint_bytes(d, C, tm, tn, p_isz, q_isz, o_isz) > budget:
                break
            bb = d
            if d * tm * tn * o_isz >= (1 << 20):   # ~1 MiB of output per step
                break

    # Deeper buffering on the streaming q / inv_b blocks (the only blocks
    # whose index changes on every innermost step) when VMEM allows.
    n_steps = Np // tn
    q_bufs = 2
    if n_steps >= 3 and _footprint_bytes(
            bb, C, tm, tn, p_isz, q_isz, o_isz, q_bufs=3) <= budget:
        q_bufs = 3

    # Normalization placement: operand scaling costs C*(tm+tn) mults per step
    # vs 2*tm*tn for output scaling -> scale operands only while C is small.
    scale_operands = C * (tm + tn) <= 2 * tm * tn

    if scale_operands:
        ia = inv_a[:, None, :]                              # (B, 1, Mp)
        ia_shape, ia_idx = (bb, 1, tm), (lambda b, m, n: (b, 0, m))
    else:
        ia = inv_a[:, :, None]                              # (B, Mp, 1)
        ia_shape, ia_idx = (bb, tm, 1), (lambda b, m, n: (b, m, 0))
    ib = inv_b[:, None, :]                                  # (B, 1, Np)

    def _maybe_buffered(shape, idx, bufs):
        if bufs <= 2:
            return pl.BlockSpec(shape, idx)
        try:
            return pl.BlockSpec(shape, idx, pipeline_mode=pl.Buffered(bufs))
        except Exception:   # older jax without pipeline_mode / Buffered
            return pl.BlockSpec(shape, idx)

    # Grid: n innermost so the resident p / inv_a blocks are not re-DMA'd
    # across the inner loop; all axes independent -> fully "parallel".
    grid = (B // bb, Mp // tm, Np // tn)

    try:
        cost = pl.CostEstimate(
            flops=2 * B * C * M * N,
            transcendentals=0,
            bytes_accessed=(p.size * p_isz + q.size * q_isz
                            + ia.size * 4 + ib.size * 4
                            + B * Mp * Np * o_isz),
        )
    except Exception:
        cost = None

    out = pl.pallas_call(
        _make_kernel(bb, scale_operands),
        out_shape=jax.ShapeDtypeStruct((B, Mp, Np), out_dtype),
        grid=grid,
        in_specs=[
            pl.BlockSpec((bb, C, tm), lambda b, m, n: (b, 0, m)),
            _maybe_buffered((bb, C, tn), lambda b, m, n: (b, 0, n), q_bufs),
            pl.BlockSpec(ia_shape, ia_idx),
            _maybe_buffered((bb, 1, tn), lambda b, m, n: (b, 0, n), q_bufs),
        ],
        out_specs=pl.BlockSpec((bb, tm, tn), lambda b, m, n: (b, m, n)),
        compiler_params=pltpu.CompilerParams(
            dimension_semantics=("parallel", "parallel", "parallel"),
            vmem_limit_bytes=int(vmem_limit),
        ),
        cost_estimate=cost,
    )(p, q, ia, ib)

    if Mp != M or Np != N:
        out = out[:, :M, :N]
    return out


def _reference(p, q):
    # Full-f32 reference of the PyTorch forward.
    sim = jnp.einsum("bcm,bcn->bmn", p.astype(jnp.float32),
                     q.astype(jnp.float32), precision=lax.Precision.HIGHEST)
    a = jnp.sqrt(jnp.sum(p.astype(jnp.float32) ** 2, axis=-2))   # (B, M)
    b = jnp.sqrt(jnp.sum(q.astype(jnp.float32) ** 2, axis=-2))   # (B, N)
    return sim / a[..., :, None] / b[..., None, :]


def _check(p, q, **kw):
    out = jax.block_until_ready(criterion_cosine_similarity(p, q, **kw))
    ref = _reference(p, q)
    assert out.shape == ref.shape, (out.shape, ref.shape)
    # Tolerance covers MXU default-precision / rsqrt-vs-divide differences
    # (cosine values are in [-1, 1]).
    max_err = float(jnp.max(jnp.abs(out.astype(jnp.float32) - ref)))
    assert jnp.allclose(out.astype(jnp.float32), ref, atol=5e-3, rtol=5e-3), max_err
    return out


if __name__ == "__main__":
    key = jax.random.PRNGKey(0)
    ks = jax.random.split(key, 8)

    # 1) Small shape consistent with the module's (batch, channels, flat-HW)
    #    usage; exercises the batch-folding path (bb=2, single grid step).
    p1 = jax.random.normal(ks[0], (2, 4, 16), dtype=jnp.float32)
    q1 = jax.random.normal(ks[1], (2, 4, 16), dtype=jnp.float32)
    _check(p1, q1)

    # 2) Tiled multi-step grid with lane-dense 128-wide output blocks
    #    (grid = (2, 2, 2)), small-C operand-scaling path.
    p2 = jax.random.normal(ks[2], (2, 8, 256), dtype=jnp.float32)
    q2 = jax.random.normal(ks[3], (2, 8, 256), dtype=jnp.float32)
    _check(p2, q2, tile_m=128, tile_n=128)

    # 3) Three inner n-steps -> exercises the deeper-buffered streaming-q path.
    p3 = jax.random.normal(ks[4], (2, 8, 256), dtype=jnp.float32)
    q3 = jax.random.normal(ks[5], (2, 8, 384), dtype=jnp.float32)
    _check(p3, q3, tile_m=128, tile_n=128)

    # 4) Non-lane-aligned M/N (padded to 256) and large C -> exercises padding
    #    plus the post-matmul output-scaling branch.
    p4 = jax.random.normal(ks[6], (1, 512, 200), dtype=jnp.float32)
    q4 = jax.random.normal(ks[7], (1, 512, 200), dtype=jnp.float32)
    _check(p4, q4)

    print("KERNEL_OK")
</pallas_src>

<mosaic_0001>
module attributes {stable_mosaic.version = 11 : i64} {
  func.func @kernel(%arg0: i32, %arg1: i32, %arg2: i32, %arg3: memref<2x4x16xf32, #tpu.memory_space<vmem>>, %arg4: memref<2x4x16xf32, #tpu.memory_space<vmem>>, %arg5: memref<2x1x16xf32, #tpu.memory_space<vmem>>, %arg6: memref<2x1x16xf32, #tpu.memory_space<vmem>>, %arg7: memref<2x16x16xf32, #tpu.memory_space<vmem>>) attributes {dimension_semantics = [#tpu.dimension_semantics<parallel>, #tpu.dimension_semantics<parallel>, #tpu.dimension_semantics<parallel>], iteration_bounds = array<i64: 1, 1, 1>, scalar_prefetch = 0 : i64, scratch_operands = 0 : i64, tpu.core_type = #tpu.core_type<tc>, window_params = [{transform_indices = @transform_0, window_bounds = array<i64: 2, 4, 16>}, {transform_indices = @transform_1, window_bounds = array<i64: 2, 4, 16>}, {transform_indices = @transform_2, window_bounds = array<i64: 2, 1, 16>}, {transform_indices = @transform_3, window_bounds = array<i64: 2, 1, 16>}, {transform_indices = @transform_4, window_bounds = array<i64: 2, 16, 16>}]} {
    %c0 = arith.constant 0 : index
    %c0_0 = arith.constant 0 : index
    %c0_1 = arith.constant 0 : index
    %0 = vector.load %arg3[%c0, %c0_0, %c0_1] : memref<2x4x16xf32, #tpu.memory_space<vmem>>, vector<1x4x16xf32>
    %1 = vector.shape_cast %0 : vector<1x4x16xf32> to vector<4x16xf32>
    %c0_2 = arith.constant 0 : index
    %c0_3 = arith.constant 0 : index
    %c0_4 = arith.constant 0 : index
    %2 = vector.load %arg4[%c0_2, %c0_3, %c0_4] : memref<2x4x16xf32, #tpu.memory_space<vmem>>, vector<1x4x16xf32>
    %3 = vector.shape_cast %2 : vector<1x4x16xf32> to vector<4x16xf32>
    %c0_5 = arith.constant 0 : index
    %c0_6 = arith.constant 0 : index
    %c0_7 = arith.constant 0 : index
    %4 = vector.load %arg5[%c0_5, %c0_6, %c0_7] : memref<2x1x16xf32, #tpu.memory_space<vmem>>, vector<1x1x16xf32>
    %5 = vector.shape_cast %4 : vector<1x1x16xf32> to vector<1x16xf32>
    %6 = vector.broadcast %5 : vector<1x16xf32> to vector<4x16xf32>
    %7 = arith.mulf %1, %6 : vector<4x16xf32>
    %c0_8 = arith.constant 0 : index
    %c0_9 = arith.constant 0 : index
    %c0_10 = arith.constant 0 : index
    %8 = vector.load %arg6[%c0_8, %c0_9, %c0_10] : memref<2x1x16xf32, #tpu.memory_space<vmem>>, vector<1x1x16xf32>
    %9 = vector.shape_cast %8 : vector<1x1x16xf32> to vector<1x16xf32>
    %10 = vector.broadcast %9 : vector<1x16xf32> to vector<4x16xf32>
    %11 = arith.mulf %3, %10 : vector<4x16xf32>
    %cst = arith.constant dense<0.000000e+00> : vector<16x16xf32>
    %12 = tpu.matmul %7, %11, %cst {dimension_numbers = #tpu.dot_dimension_numbers<[0], [0], [1], [1], [0, 1, 1, 1], [], []>} : vector<4x16xf32>, vector<4x16xf32>, vector<16x16xf32> -> vector<16x16xf32>
    %c0_11 = arith.constant 0 : index
    %c0_12 = arith.constant 0 : index
    %c0_13 = arith.constant 0 : index
    %13 = vector.load %arg7[%c0_11, %c0_12, %c0_13] : memref<2x16x16xf32, #tpu.memory_space<vmem>>, vector<1x16x16xf32>
    %14 = vector.shape_cast %13 : vector<1x16x16xf32> to vector<16x16xf32>
    %15 = vector.shape_cast %12 : vector<16x16xf32> to vector<1x16x16xf32>
    tpu.vector_store %arg7[%c0_11, %c0_12, %c0_13], %15 {strides = array<i32>} : memref<2x16x16xf32, #tpu.memory_space<vmem>>, vector<1x16x16xf32>,
    %c1 = arith.constant 1 : index
    %c0_14 = arith.constant 0 : index
    %c0_15 = arith.constant 0 : index
    %16 = vector.load %arg3[%c1, %c0_14, %c0_15] : memref<2x4x16xf32, #tpu.memory_space<vmem>>, vector<1x4x16xf32>
    %17 = vector.shape_cast %16 : vector<1x4x16xf32> to vector<4x16xf32>
    %c1_16 = arith.constant 1 : index
    %c0_17 = arith.constant 0 : index
    %c0_18 = arith.constant 0 : index
    %18 = vector.load %arg4[%c1_16, %c0_17, %c0_18] : memref<2x4x16xf32, #tpu.memory_space<vmem>>, vector<1x4x16xf32>
    %19 = vector.shape_cast %18 : vector<1x4x16xf32> to vector<4x16xf32>
    %c1_19 = arith.constant 1 : index
    %c0_20 = arith.constant 0 : index
    %c0_21 = arith.constant 0 : index
    %20 = vector.load %arg5[%c1_19, %c0_20, %c0_21] : memref<2x1x16xf32, #tpu.memory_space<vmem>>, vector<1x1x16xf32>
    %21 = vector.shape_cast %20 : vector<1x1x16xf32> to vector<1x16xf32>
    %22 = vector.broadcast %21 : vector<1x16xf32> to vector<4x16xf32>
    %23 = arith.mulf %17, %22 : vector<4x16xf32>
    %c1_22 = arith.constant 1 : index
    %c0_23 = arith.constant 0 : index
    %c0_24 = arith.constant 0 : index
    %24 = vector.load %arg6[%c1_22, %c0_23, %c0_24] : memref<2x1x16xf32, #tpu.memory_space<vmem>>, vector<1x1x16xf32>
    %25 = vector.shape_cast %24 : vector<1x1x16xf32> to vector<1x16xf32>
    %26 = vector.broadcast %25 : vector<1x16xf32> to vector<4x16xf32>
    %27 = arith.mulf %19, %26 : vector<4x16xf32>
    %cst_25 = arith.constant dense<0.000000e+00> : vector<16x16xf32>
    %28 = tpu.matmul %23, %27, %cst_25 {dimension_numbers = #tpu.dot_dimension_numbers<[0], [0], [1], [1], [0, 1, 1, 1], [], []>} : vector<4x16xf32>, vector<4x16xf32>, vector<16x16xf32> -> vector<16x16xf32>
    %c1_26 = arith.constant 1 : index
    %c0_27 = arith.constant 0 : index
    %c0_28 = arith.constant 0 : index
    %29 = vector.load %arg7[%c1_26, %c0_27, %c0_28] : memref<2x16x16xf32, #tpu.memory_space<vmem>>, vector<1x16x16xf32>
    %30 = vector.shape_cast %29 : vector<1x16x16xf32> to vector<16x16xf32>
    %31 = vector.shape_cast %28 : vector<16x16xf32> to vector<1x16x16xf32>
    tpu.vector_store %arg7[%c1_26, %c0_27, %c0_28], %31 {strides = array<i32>} : memref<2x16x16xf32, #tpu.memory_space<vmem>>, vector<1x16x16xf32>,
    return
  }
  func.func @transform_0(%arg0: i32, %arg1: i32, %arg2: i32) -> (i32, i32, i32) {
    %c0_i32 = arith.constant 0 : i32
    %c0_i32_0 = arith.constant 0 : i32
    return %arg0, %c0_i32, %arg1 : i32, i32, i32
  }
  func.func @transform_1(%arg0: i32, %arg1: i32, %arg2: i32) -> (i32, i32, i32) {
    %c0_i32 = arith.constant 0 : i32
    %c0_i32_0 = arith.constant 0 : i32
    return %arg0, %c0_i32, %arg2 : i32, i32, i32
  }
  func.func @transform_2(%arg0: i32, %arg1: i32, %arg2: i32) -> (i32, i32, i32) {
    %c0_i32 = arith.constant 0 : i32
    %c0_i32_0 = arith.constant 0 : i32
    return %arg0, %c0_i32, %arg1 : i32, i32, i32
  }
  func.func @transform_3(%arg0: i32, %arg1: i32, %arg2: i32) -> (i32, i32, i32) {
    %c0_i32 = arith.constant 0 : i32
    %c0_i32_0 = arith.constant 0 : i32
    return %arg0, %c0_i32, %arg2 : i32, i32, i32
  }
  func.func @transform_4(%arg0: i32, %arg1: i32, %arg2: i32) -> (i32, i32, i32) {
    %c0_i32 = arith.constant 0 : i32
    return %arg0, %arg1, %arg2 : i32, i32, i32
  }
}

</mosaic_0001>

<llo_original>
// kernel: tpu_custom_call.1
$region0: #{tpu_custom_call.1}
  #allocation0 [shape = 'u32[]', space=smem, size = 0x4, offset = 0x4, fixed_abs, tag = 'smem constant byte address 0x4 - core index']
  #allocation1 [shape = 'u32[144,128]{1,0:T(1,128)}', space=vmem, size = 0x12000, scoped, tag = 'internal scratch']
  %s0 = inlined_call_operand.hbm [shape: f32[2,4,16], index: 0, kind: input, shape index: {}]
  %s1 = inlined_call_operand.hbm [shape: f32[2,4,16], index: 1, kind: input, shape index: {}]
  %s2 = inlined_call_operand.vmem [shape: f32[2,1,16], index: 2, kind: input, shape index: {}]
  %s3 = inlined_call_operand.vmem [shape: f32[2,1,16], index: 3, kind: input, shape index: {}]
  %s4 = inlined_call_operand.hbm [shape: f32[2,16,16], index: 4, kind: output, shape index: {}]
  %s5 = sld [smem:[#allocation0]]
  $region34: #{tpu_custom_call.1} parent=0
    _
  %s7 = ssub.s32 1, %s5
  %s8 = scalar_select 0, %s7, %s5
  $region1: #{tpu_custom_call.1} parent=0
    #allocation2 [shape = 'u8[4096]{0}', space=vmem, size = 0x1000, scoped, tag = 'input window, operand 0, single buffered']
    #allocation3 [shape = 's32[1]{0}', space=sflag, size = 0x4, scoped, tag = 'scoped memory for tpu_custom_call.1']
    #allocation4 [shape = 's32[1]{0}', space=sflag, size = 0x4, scoped, tag = 'scoped memory for tpu_custom_call.1']
    #allocation5 [shape = 'u8[4096]{0}', space=vmem, size = 0x1000, scoped, tag = 'input window, operand 1, single buffered']
    #allocation6 [shape = 's32[1]{0}', space=sflag, size = 0x4, scoped, tag = 'scoped memory for tpu_custom_call.1']
    #allocation7 [shape = 'u8[16384]{0}', space=vmem, size = 0x4000, scoped, tag = 'output window, operand 0, single buffered']
    %9 = vsyncpa [#allocation3], 0
    %10 = vsyncpa [#allocation6], 0
    %11 = vsyncpa [#allocation4], 0
    // Predicated region
    $region2: #{tpu_custom_call.1} parent=1 // pred_check
      _
    $region3: #{tpu_custom_call.1} parent=1 // pred_check_branch
      %13 = sbr.rel (0) target = $region5
    $region4: #{tpu_custom_call.1} parent=1 // pred_region
      %s15 = ssub.s32 128, 128
      %16 = vsyncadd [#allocation3], %s15
      %s17 = sshll.u32 [#allocation2], 4
      %s18 = int_to_ptr.vmem [resolvable:$true] %s17
      %23 = dma.hbm_to_vmem [thread:$0]  %s0, 128, %s18, [#allocation3], 64, 64, 4
    $region5: #{tpu_custom_call.1} parent=1 // pred_fallthru
      _
    // Predicated region
    $region6: #{tpu_custom_call.1} parent=1 // pred_check
      _
    $region7: #{tpu_custom_call.1} parent=1 // pred_check_branch
      %25 = sbr.rel (0) target = $region9
    $region8: #{tpu_custom_call.1} parent=1 // pred_region
      %s27 = ssub.s32 128, 128
      %28 = vsyncadd [#allocation6], %s27
      %s29 = sshll.u32 [#allocation5], 4
      %s30 = int_to_ptr.vmem [resolvable:$true] %s29
      %35 = dma.hbm_to_vmem [thread:$0]  %s1, 128, %s30, [#allocation6], 64, 64, 4
    $region9: #{tpu_custom_call.1} parent=1 // pred_fallthru
      _
    // Predicated region
    $region10: #{tpu_custom_call.1} parent=1 // pred_check
      _
    $region11: #{tpu_custom_call.1} parent=1 // pred_check_branch
      %37 = sbr.rel (0) target = $region13
    $region12: #{tpu_custom_call.1} parent=1 // pred_region
      _
    $region13: #{tpu_custom_call.1} parent=1 // pred_fallthru
      _
    // Predicated region
    $region14: #{tpu_custom_call.1} parent=1 // pred_check
      _
    $region15: #{tpu_custom_call.1} parent=1 // pred_check_branch
      %39 = sbr.rel (0) target = $region17
    $region16: #{tpu_custom_call.1} parent=1 // pred_region
      _
    $region17: #{tpu_custom_call.1} parent=1 // pred_fallthru
      _
    // Predicated region
    $region18: #{tpu_custom_call.1} parent=1 // pred_check
      _
    $region19: #{tpu_custom_call.1} parent=1 // pred_check_branch
      %41 = sbr.rel (0) target = $region21
    $region20: #{tpu_custom_call.1} parent=1 // pred_region
      %42 = dma.done [#allocation3], 128
    $region21: #{tpu_custom_call.1} parent=1 // pred_fallthru
      _
    // Predicated region
    $region22: #{tpu_custom_call.1} parent=1 // pred_check
      _
    $region23: #{tpu_custom_call.1} parent=1 // pred_check_branch
      %44 = sbr.rel (0) target = $region25
    $region24: #{tpu_custom_call.1} parent=1 // pred_region
      %45 = dma.done [#allocation6], 128
    $region25: #{tpu_custom_call.1} parent=1 // pred_fallthru
      _
    %v46 = vld [vmem:[#allocation2] sm:$0xf]
    %v47 = vld [vmem:[#allocation5] sm:$0xf]
    %v48 = vld [vmem:[%s2] sm:$0x1]
    %v50 = vlaneseq
    %v51 = vshrl.u32 %v50, 7
    %v52 = vsub.s32 0, %v51
    %v53 = vrot.slane %v48, %v52
    %v55 = vmul.f32 %v46, %v53
    %v56 = vld [vmem:[%s3] sm:$0x1]
    %v58 = vlaneseq
    %v59 = vshrl.u32 %v58, 7
    %v60 = vsub.s32 0, %v59
    %v61 = vrot.slane %v56, %v60
    %v63 = vmul.f32 %v47, %v61
    %64 = vxpose.xlu0.b32.start [1/16] %v55, 128
    %65 = vxpose.xlu0.b32.cont [2/16] 0.0, 128
    %66 = vxpose.xlu0.b32.cont [3/16] 0.0, 128
    %67 = vxpose.xlu0.b32.cont [4/16] 0.0, 128
    %68 = vxpose.xlu0.b32.cont [5/16] 0.0, 128
    %69 = vxpose.xlu0.b32.cont [6/16] 0.0, 128
    %70 = vxpose.xlu0.b32.cont [7/16] 0.0, 128
    %71 = vxpose.xlu0.b32.cont [8/16] 0.0, 128
    %72 = vxpose.xlu0.b32.cont [9/16] 0.0, 128
    %73 = vxpose.xlu0.b32.cont [10/16] 0.0, 128
    %74 = vxpose.xlu0.b32.cont [11/16] 0.0, 128
    %75 = vxpose.xlu0.b32.cont [12/16] 0.0, 128
    %76 = vxpose.xlu0.b32.cont [13/16] 0.0, 128
    %77 = vxpose.xlu0.b32.cont [14/16] 0.0, 128
    %78 = vxpose.xlu0.b32.cont [15/16] 0.0, 128
    %79 = vxpose.xlu0.b32.end [16/16] 0.0, 128
    %v80 = vpop.trf.xlu0
    %v81 = vpop.trf.xlu0
    %v82 = vpop.trf.xlu0
    %v83 = vpop.trf.xlu0
    %v84 = vpop.trf.xlu0
    %v85 = vpop.trf.xlu0
    %v86 = vpop.trf.xlu0
    %v87 = vpop.trf.xlu0
    %v88 = vpop.trf.xlu0
    %v89 = vpop.trf.xlu0
    %v90 = vpop.trf.xlu0
    %v91 = vpop.trf.xlu0
    %v92 = vpop.trf.xlu0
    %v93 = vpop.trf.xlu0
    %v94 = vpop.trf.xlu0
    %v95 = vpop.trf.xlu0
    %vm96 = vcmask 31744
    %v98 = vsel %vm96, %v80, 0
    %v101 = vsel %vm96, %v81, 0
    %vm103 = vcmask 1043456
    %v105 = vsel %vm103, %v63, 0
    %107 = vmatprep.subr.mxu0 0.0
    %108 = vmatpush1.msra.mxu0 0.0
    %109 = vmatprep.subr.mxu0 0.0
    %110 = vmatpush1.msra.mxu0 0.0
    %111 = vmatprep.subr.mxu0 0.0
    %112 = vmatpush1.msra.mxu0 0.0
    %113 = vmatprep.subr.mxu0 0.0
    %114 = vmatpush1.msra.mxu0 0.0
    %115 = vmatprep.subr.mxu0 0.0
    %116 = vmatpush1.msra.mxu0 0.0
    %117 = vmatprep.subr.mxu0 0.0
    %118 = vmatpush1.msra.mxu0 0.0
    %119 = vmatprep.subr.mxu0 0.0
    %120 = vmatpush1.msra.mxu0 0.0
    %121 = vmatprep.subr.mxu0 0.0
    %122 = vmatpush1.msra.mxu0 0.0
    %123 = vmatprep.subr.mxu0 0.0
    %124 = vmatpush1.msra.mxu0 0.0
    %125 = vmatprep.subr.mxu0 0.0
    %126 = vmatpush1.msra.mxu0 0.0
    %127 = vmatprep.subr.mxu0 0.0
    %128 = vmatpush1.msra.mxu0 0.0
    %129 = vmatprep.subr.mxu0 0.0
    %130 = vmatpush1.msra.mxu0 0.0
    %131 = vmatprep.subr.mxu0 0.0
    %132 = vmatpush1.msra.mxu0 0.0
    %133 = vmatprep.subr.mxu0 0.0
    %134 = vmatpush1.msra.mxu0 0.0
    %135 = vmatprep.subr.mxu0 0.0
    %136 = vmatpush1.msra.mxu0 0.0
    %137 = vmatprep.subr.mxu0 0.0
    %138 = vmatpush1.msra.mxu0 %v105
    %139 = vmatprep.subr.mxu0 0.0
    %140 = vmatpush2.msra.mxu0 0.0
    %141 = vmatprep.subr.mxu0 0.0
    %142 = vmatpush2.msra.mxu0 0.0
    %143 = vmatprep.subr.mxu0 0.0
    %144 = vmatpush2.msra.mxu0 0.0
    %145 = vmatprep.subr.mxu0 0.0
    %146 = vmatpush2.msra.mxu0 0.0
    %147 = vmatprep.subr.mxu0 0.0
    %148 = vmatpush2.msra.mxu0 0.0
    %149 = vmatprep.subr.mxu0 0.0
    %150 = vmatpush2.msra.mxu0 0.0
    %151 = vmatprep.subr.mxu0 0.0
    %152 = vmatpush2.msra.mxu0 0.0
    %153 = vmatprep.subr.mxu0 0.0
    %154 = vmatpush2.msra.mxu0 0.0
    %155 = vmatprep.subr.mxu0 0.0
    %156 = vmatpush2.msra.mxu0 0.0
    %157 = vmatprep.subr.mxu0 0.0
    %158 = vmatpush2.msra.mxu0 0.0
    %159 = vmatprep.subr.mxu0 0.0
    %160 = vmatpush2.msra.mxu0 0.0
    %161 = vmatprep.subr.mxu0 0.0
    %162 = vmatpush2.msra.mxu0 0.0
    %163 = vmatprep.subr.mxu0 0.0
    %164 = vmatpush2.msra.mxu0 0.0
    %165 = vmatprep.subr.mxu0 0.0
    %166 = vmatpush2.msra.mxu0 0.0
    %167 = vmatprep.subr.mxu0 0.0
    %168 = vmatpush2.msra.mxu0 0.0
    %169 = vmatprep.subr.mxu0 0.0
    %170 = vmatpush2.msra.mxu0 0.0
    %171 = vmatprep.mubr.f32.mxu0 0.0
    %172 = vmatmul.mubr.f32.gmra.mxu0 %v98
    %v173 = vpop.f32.mrf.mxu0
    %v174 = vadd.f32 0.0, %v173
    %v175 = vpop.f32.mrf.mxu0
    %176 = vmatprep.mubr.f32.mxu0 0.0
    %177 = vmatmul.mubr.f32.gmra.mxu0 %v101
    %v178 = vpop.f32.mrf.mxu0
    %v179 = vadd.f32 0.0, %v178
    %v180 = vpop.f32.mrf.mxu0
    %181 = vdwg.mxu0
    %vm182 = vcmask 130048
    %183 = vst.msk [vmem:[#allocation7] sm:$0xff] %vm182, %v174
    %184 = vst.msk [vmem:[#allocation7 + $0x8] sm:$0xff] %vm182, %v179
    %s185 = scalar_lea.vmem [#allocation2], 4
    %v186 = vld [vmem:[%s185] sm:$0xf]
    %s187 = scalar_lea.vmem [#allocation5], 4
    %v188 = vld [vmem:[%s187] sm:$0xf]
    %s189 = scalar_lea.vmem %s2, 1
    %v190 = vld [vmem:[%s189] sm:$0x1]
    %v192 = vlaneseq
    %v193 = vshrl.u32 %v192, 7
    %v194 = vsub.s32 0, %v193
    %v195 = vrot.slane %v190, %v194
    %v197 = vmul.f32 %v186, %v195
    %s198 = scalar_lea.vmem %s3, 1
    %v199 = vld [vmem:[%s198] sm:$0x1]
    %v201 = vlaneseq
    %v202 = vshrl.u32 %v201, 7
    %v203 = vsub.s32 0, %v202
    %v204 = vrot.slane %v199, %v203
    %v206 = vmul.f32 %v188, %v204
    %207 = vxpose.xlu0.b32.start [1/16] %v197, 128
    %208 = vxpose.xlu0.b32.cont [2/16] 0.0, 128
    %209 = vxpose.xlu0.b32.cont [3/16] 0.0, 128
    %210 = vxpose.xlu0.b32.cont [4/16] 0.0, 128
    %211 = vxpose.xlu0.b32.cont [5/16] 0.0, 128
    %212 = vxpose.xlu0.b32.cont [6/16] 0.0, 128
    %213 = vxpose.xlu0.b32.cont [7/16] 0.0, 128
    %214 = vxpose.xlu0.b32.cont [8/16] 0.0, 128
    %215 = vxpose.xlu0.b32.cont [9/16] 0.0, 128
    %216 = vxpose.xlu0.b32.cont [10/16] 0.0, 128
    %217 = vxpose.xlu0.b32.cont [11/16] 0.0, 128
    %218 = vxpose.xlu0.b32.cont [12/16] 0.0, 128
    %219 = vxpose.xlu0.b32.cont [13/16] 0.0, 128
    %220 = vxpose.xlu0.b32.cont [14/16] 0.0, 128
    %221 = vxpose.xlu0.b32.cont [15/16] 0.0, 128
    %222 = vxpose.xlu0.b32.end [16/16] 0.0, 128
    %v223 = vpop.trf.xlu0
    %v224 = vpop.trf.xlu0
    %v225 = vpop.trf.xlu0
    %v226 = vpop.trf.xlu0
    %v227 = vpop.trf.xlu0
    %v228 = vpop.trf.xlu0
    %v229 = vpop.trf.xlu0
    %v230 = vpop.trf.xlu0
    %v231 = vpop.trf.xlu0
    %v232 = vpop.trf.xlu0
    %v233 = vpop.trf.xlu0
    %v234 = vpop.trf.xlu0
    %v235 = vpop.trf.xlu0
    %v236 = vpop.trf.xlu0
    %v237 = vpop.trf.xlu0
    %v238 = vpop.trf.xlu0
    %v240 = vsel %vm96, %v223, 0
    %v243 = vsel %vm96, %v224, 0
    %v246 = vsel %vm103, %v206, 0
    %248 = vmatprep.subr.mxu0 0.0
    %249 = vmatpush1.msra.mxu0 0.0
    %250 = vmatprep.subr.mxu0 0.0
    %251 = vmatpush1.msra.mxu0 0.0
    %252 = vmatprep.subr.mxu0 0.0
    %253 = vmatpush1.msra.mxu0 0.0
    %254 = vmatprep.subr.mxu0 0.0
    %255 = vmatpush1.msra.mxu0 0.0
    %256 = vmatprep.subr.mxu0 0.0
    %257 = vmatpush1.msra.mxu0 0.0
    %258 = vmatprep.subr.mxu0 0.0
    %259 = vmatpush1.msra.mxu0 0.0
    %260 = vmatprep.subr.mxu0 0.0
    %261 = vmatpush1.msra.mxu0 0.0
    %262 = vmatprep.subr.mxu0 0.0
    %263 = vmatpush1.msra.mxu0 0.0
    %264 = vmatprep.subr.mxu0 0.0
    %265 = vmatpush1.msra.mxu0 0.0
    %266 = vmatprep.subr.mxu0 0.0
    %267 = vmatpush1.msra.mxu0 0.0
    %268 = vmatprep.subr.mxu0 0.0
    %269 = vmatpush1.msra.mxu0 0.0
    %270 = vmatprep.subr.mxu0 0.0
    %271 = vmatpush1.msra.mxu0 0.0
    %272 = vmatprep.subr.mxu0 0.0
    %273 = vmatpush1.msra.mxu0 0.0
    %274 = vmatprep.subr.mxu0 0.0
    %275 = vmatpush1.msra.mxu0 0.0
    %276 = vmatprep.subr.mxu0 0.0
    %277 = vmatpush1.msra.mxu0 0.0
    %278 = vmatprep.subr.mxu0 0.0
    %279 = vmatpush1.msra.mxu0 %v246
    %280 = vmatprep.subr.mxu0 0.0
    %281 = vmatpush2.msra.mxu0 0.0
    %282 = vmatprep.subr.mxu0 0.0
    %283 = vmatpush2.msra.mxu0 0.0
    %284 = vmatprep.subr.mxu0 0.0
    %285 = vmatpush2.msra.mxu0 0.0
    %286 = vmatprep.subr.mxu0 0.0
    %287 = vmatpush2.msra.mxu0 0.0
    %288 = vmatprep.subr.mxu0 0.0
    %289 = vmatpush2.msra.mxu0 0.0
    %290 = vmatprep.subr.mxu0 0.0
    %291 = vmatpush2.msra.mxu0 0.0
    %292 = vmatprep.subr.mxu0 0.0
    %293 = vmatpush2.msra.mxu0 0.0
    %294 = vmatprep.subr.mxu0 0.0
    %295 = vmatpush2.msra.mxu0 0.0
    %296 = vmatprep.subr.mxu0 0.0
    %297 = vmatpush2.msra.mxu0 0.0
    %298 = vmatprep.subr.mxu0 0.0
    %299 = vmatpush2.msra.mxu0 0.0
    %300 = vmatprep.subr.mxu0 0.0
    %301 = vmatpush2.msra.mxu0 0.0
    %302 = vmatprep.subr.mxu0 0.0
    %303 = vmatpush2.msra.mxu0 0.0
    %304 = vmatprep.subr.mxu0 0.0
    %305 = vmatpush2.msra.mxu0 0.0
    %306 = vmatprep.subr.mxu0 0.0
    %307 = vmatpush2.msra.mxu0 0.0
    %308 = vmatprep.subr.mxu0 0.0
    %309 = vmatpush2.msra.mxu0 0.0
    %310 = vmatprep.subr.mxu0 0.0
    %311 = vmatpush2.msra.mxu0 0.0
    %312 = vmatprep.mubr.f32.mxu0 0.0
    %313 = vmatmul.mubr.f32.gmra.mxu0 %v240
    %v314 = vpop.f32.mrf.mxu0
    %v315 = vadd.f32 0.0, %v314
    %v316 = vpop.f32.mrf.mxu0
    %317 = vmatprep.mubr.f32.mxu0 0.0
    %318 = vmatmul.mubr.f32.gmra.mxu0 %v243
    %v319 = vpop.f32.mrf.mxu0
    %v320 = vadd.f32 0.0, %v319
    %v321 = vpop.f32.mrf.mxu0
    %322 = vdwg.mxu0
    %s323 = scalar_lea.vmem [#allocation7], 16
    %324 = vst.msk [vmem:[%s323] sm:$0xff] %vm182, %v315
    %325 = vst.msk [vmem:[%s323 + $0x8] sm:$0xff] %vm182, %v320
    // Predicated region
    $region26: #{tpu_custom_call.1} parent=1 // pred_check
      _
    $region27: #{tpu_custom_call.1} parent=1 // pred_check_branch
      %327 = sbr.rel (0) target = $region29
    $region28: #{tpu_custom_call.1} parent=1 // pred_region
      %s329 = ssub.s32 512, 512
      %330 = vsyncadd [#allocation4], %s329
      %s331 = sshll.u32 [#allocation7], 4
      %s332 = int_to_ptr.vmem [resolvable:$true] %s331
      %337 = dma.vmem_to_hbm [thread:$0]  %s332, 512, %s4, [#allocation4], 128, 128, 8
    $region29: #{tpu_custom_call.1} parent=1 // pred_fallthru
      _
    // Predicated region
    $region30: #{tpu_custom_call.1} parent=1 // pred_check
      _
    $region31: #{tpu_custom_call.1} parent=1 // pred_check_branch
      %339 = sbr.rel (0) target = $region33
    $region32: #{tpu_custom_call.1} parent=1 // pred_region
      %340 = dma.done [#allocation4], 512
    $region33: #{tpu_custom_call.1} parent=1 // pred_fallthru
      _
    %341 = vsyncpa [#allocation3], 1
    %342 = vsyncpa [#allocation6], 1
    %343 = vsyncpa [#allocation4], 1

</llo_original>
